<compile_context>
chip_gen: v7x
topology: tpu7x:2x2x1
jax: 0.10.0
libtpu: 0.0.40
codegen_flags: <defaults>
</compile_context>

<pallas_src>
import math

import jax
import jax.numpy as jnp
from jax import lax
from jax.experimental import pallas as pl
from jax.experimental.pallas import tpu as pltpu

_BF16 = jnp.bfloat16


def _layernorm(h, gamma, beta, eps=1e-5):
    mu = jnp.mean(h, axis=-1, keepdims=True)
    var = jnp.mean((h - mu) ** 2, axis=-1, keepdims=True)
    return (h - mu) * lax.rsqrt(var + eps) * gamma + beta


# ----------------------------------------------------------------------------
# Hoisted projection kernel: one fused wide matmul, outputs split into bf16
# q/k/v (or k/v) tensors that the decoder kernel consumes per query tile.
# ----------------------------------------------------------------------------
def _split_project_kernel(x_ref, w_ref, b_ref, *out_refs):
    d_out = out_refs[0].shape[-1]
    proj = jnp.dot(x_ref[0].astype(_BF16), w_ref[...],
                   preferred_element_type=jnp.float32) + b_ref[...]
    for i, o_ref in enumerate(out_refs):
        o_ref[0] = proj[:, i * d_out:(i + 1) * d_out].astype(o_ref.dtype)


def _project(x, w_cat, b_cat, n_out):
    B, T, D = x.shape
    d_cat = w_cat.shape[1]
    d_out = d_cat // n_out
    out_sds = tuple(jax.ShapeDtypeStruct((B, T, d_out), _BF16)
                    for _ in range(n_out))
    return pl.pallas_call(
        _split_project_kernel,
        out_shape=out_sds,
        grid=(B,),
        in_specs=[
            pl.BlockSpec((1, T, D), lambda b: (b, 0, 0)),
            pl.BlockSpec((D, d_cat), lambda b: (0, 0)),
            pl.BlockSpec((1, d_cat), lambda b: (0, 0)),
        ],
        out_specs=tuple(pl.BlockSpec((1, T, d_out), lambda b: (b, 0, 0))
                        for _ in range(n_out)),
        compiler_params=pltpu.CompilerParams(
            dimension_semantics=("parallel",)),
    )(x, w_cat, b_cat)


# ----------------------------------------------------------------------------
# Main decoder-layer kernel (per batch element, per query-row tile).
# ----------------------------------------------------------------------------
def _decoder_layer_kernel(x_ref, qs_ref, ks_ref, vs_ref, kc_ref, vc_ref,
                          wp_ref, bp_ref, w1_ref, b1_ref, w2_ref, b2_ref,
                          ln_ref, out_ref):
    x = x_ref[0]        # (TL, D) f32 residual stream
    q_s = qs_ref[0]     # (TL, D) bf16, 1/sqrt(D) scale already folded in
    k_s = ks_ref[0]     # (L, D)  bf16
    v_s = vs_ref[0]     # (L, D)  bf16
    k_c = kc_ref[0]     # (S, D)  bf16
    v_c = vc_ref[0]     # (S, D)  bf16

    def attend(q_bf, k_bf, v_bf, wo, bo):
        # scores = q @ k^T  (scale folded into q); f32 accumulation on MXU.
        s = lax.dot_general(q_bf, k_bf, (((1,), (1,)), ((), ())),
                            preferred_element_type=jnp.float32)
        m = jnp.max(s, axis=-1, keepdims=True)
        e = jnp.exp(s - m)                               # f32, EUP
        denom = jnp.sum(e, axis=-1, keepdims=True)
        # Unnormalized PV matmul in bf16, normalize afterwards on (TL, D)
        # instead of scaling the (TL, L) score matrix.
        o = jnp.dot(e.astype(_BF16), v_bf, preferred_element_type=jnp.float32)
        o = o * pl.reciprocal(denom, approx=True)        # EUP, not VPU divide
        return jnp.dot(o.astype(_BF16), wo,
                       preferred_element_type=jnp.float32) + bo

    # --- self attention + residual + norm1 (dropout == identity) ---
    new_x1 = attend(q_s, k_s, v_s, wp_ref[0], bp_ref[0])
    x = _layernorm(x + new_x1, ln_ref[0], ln_ref[1])

    # --- cross attention + residual + norm2 (Q from post-norm1 x) ---
    q_c = (jnp.dot(x.astype(_BF16), wp_ref[1],
                   preferred_element_type=jnp.float32)
           + bp_ref[1]).astype(_BF16)
    new_x2 = attend(q_c, k_c, v_c, wp_ref[2], bp_ref[2])
    x = _layernorm(x + new_x2, ln_ref[2], ln_ref[3])

    # --- pointwise FFN: conv1(k=1) -> relu -> conv2(k=1), residual ---
    y = jnp.dot(x.astype(_BF16), w1_ref[...],
                preferred_element_type=jnp.float32) + b1_ref[...]
    y = jnp.maximum(y, 0.0)
    y = jnp.dot(y.astype(_BF16), w2_ref[...],
                preferred_element_type=jnp.float32) + b2_ref[...]

    out_ref[0] = (x + y).astype(out_ref.dtype)


def _pick_q_tile(L, q_tile):
    for t in (q_tile, 256, 128, 64, 32, 16):
        if t is not None and 0 < t <= L and L % t == 0 and t % 16 == 0:
            return t
    return L


def _vmem_limit_bytes(L, S, D, d_ff, TL):
    f32, bf16 = 4, 2
    # double-buffered activation blocks
    acts = 2 * (TL * D * f32           # x tile
                + TL * D * bf16        # q_self tile
                + 2 * L * D * bf16     # self K/V
                + 2 * S * D * bf16     # cross K/V
                + TL * D * f32)        # output tile
    # double-buffered grid-invariant weights / biases / LN
    weights = 2 * ((3 * D * D + D * d_ff + d_ff * D) * bf16
                   + (3 * D + d_ff + D + 4 * D) * f32)
    # in-kernel temporaries (scores/exp, attention out, residuals, FFN hidden)
    temps = (2 * TL * max(L, S) * (f32 + bf16)
             + 8 * TL * D * f32
             + TL * d_ff * (f32 + bf16))
    total = acts + weights + temps
    # 2x headroom for compiler temporaries; cap at 48 MiB so 16 MiB of v7x's
    # 64 MiB physical VMEM stays free (no full-VMEM clamp).
    return int(min(48 * 1024 * 1024, max(32 * 1024 * 1024, 2 * total)))


def decoder_layer(x, cross, params, *, q_tile=256):
    B, L, D = x.shape
    S = cross.shape[1]
    d_ff = params["w1"].shape[1]
    scale = 1.0 / math.sqrt(D)

    w_sa, b_sa = params["w_sa"], params["b_sa"]
    w_ca, b_ca = params["w_ca"], params["b_ca"]

    # Fused projection weights; softmax scale folded into Wq / bq.
    w_qkv_self = jnp.concatenate([w_sa[0] * scale, w_sa[1], w_sa[2]],
                                 axis=1).astype(_BF16)            # (D, 3D)
    b_qkv_self = jnp.concatenate([b_sa[0] * scale, b_sa[1], b_sa[2]], axis=1)
    w_kv_cross = jnp.concatenate([w_ca[1], w_ca[2]], axis=1).astype(_BF16)
    b_kv_cross = jnp.concatenate([b_ca[1], b_ca[2]], axis=1)
    w_proj = jnp.stack([w_sa[3], w_ca[0] * scale, w_ca[3]]).astype(_BF16)
    b_proj = jnp.stack([b_sa[3], b_ca[0] * scale, b_ca[3]])
    w1 = params["w1"].astype(_BF16)
    w2 = params["w2"].astype(_BF16)

    # Hoisted projections: computed once per sequence (not once per q tile).
    q_s, k_s, v_s = _project(x, w_qkv_self, b_qkv_self, 3)
    k_c, v_c = _project(cross, w_kv_cross, b_kv_cross, 2)

    TL = _pick_q_tile(L, q_tile)
    grid = (B, L // TL)

    flops = 2 * B * L * (2 * L * D + 2 * S * D + 3 * D * D + 2 * D * d_ff)
    transcendentals = B * L * (L + S)
    bytes_accessed = (2 * B * L * D * 4                       # x in, out f32
                      + B * L * D * 2                         # q_self bf16
                      + grid[1] * B * 2 * (L + S) * D * 2     # K/V per q tile
                      + 2 * (3 * D * D + D * d_ff + d_ff * D) * 2)

    out = pl.pallas_call(
        _decoder_layer_kernel,
        out_shape=jax.ShapeDtypeStruct((B, L, D), jnp.float32),
        grid=grid,
        in_specs=[
            pl.BlockSpec((1, TL, D), lambda b, q: (b, q, 0)),   # x query tile
            pl.BlockSpec((1, TL, D), lambda b, q: (b, q, 0)),   # q_self tile
            pl.BlockSpec((1, L, D), lambda b, q: (b, 0, 0)),    # k_self
            pl.BlockSpec((1, L, D), lambda b, q: (b, 0, 0)),    # v_self
            pl.BlockSpec((1, S, D), lambda b, q: (b, 0, 0)),    # k_cross
            pl.BlockSpec((1, S, D), lambda b, q: (b, 0, 0)),    # v_cross
            pl.BlockSpec((3, D, D), lambda b, q: (0, 0, 0)),    # Wo_sa|Wq_ca|Wo_ca
            pl.BlockSpec((3, 1, D), lambda b, q: (0, 0, 0)),    # their biases
            pl.BlockSpec((D, d_ff), lambda b, q: (0, 0)),       # conv1 (pointwise)
            pl.BlockSpec((1, d_ff), lambda b, q: (0, 0)),
            pl.BlockSpec((d_ff, D), lambda b, q: (0, 0)),       # conv2 (pointwise)
            pl.BlockSpec((1, D), lambda b, q: (0, 0)),
            pl.BlockSpec((4, 1, D), lambda b, q: (0, 0, 0)),    # ln1/ln2 gamma,beta
        ],
        out_specs=pl.BlockSpec((1, TL, D), lambda b, q: (b, q, 0)),
        compiler_params=pltpu.CompilerParams(
            dimension_semantics=("parallel", "parallel"),
            vmem_limit_bytes=_vmem_limit_bytes(L, S, D, d_ff, TL)),
        cost_estimate=pl.CostEstimate(
            flops=int(flops),
            transcendentals=int(transcendentals),
            bytes_accessed=int(bytes_accessed)),
    )(x, q_s, k_s, v_s, k_c, v_c, w_proj, b_proj,
      w1, params["b1"], w2, params["b2"], params["ln"])

    # TODO(synk): omegas/thetas penalties come from the injected Deformer
    # attention modules (not defined in this file); returned as zero sums.
    zero = jnp.float32(0.0)
    return out, zero + zero, zero + zero


# ----------------------------------------------------------------------------
# Pure-JAX f32 reference for correctness checking.
# ----------------------------------------------------------------------------
def decoder_layer_ref(x, cross, params):
    def attn(q_in, kv_in, w, b):
        q = q_in @ w[0] + b[0]
        k = kv_in @ w[1] + b[1]
        v = kv_in @ w[2] + b[2]
        s = jnp.einsum("bld,bsd->bls", q, k) / math.sqrt(q.shape[-1])
        p = jax.nn.softmax(s, axis=-1)
        return jnp.einsum("bls,bsd->bld", p, v) @ w[3] + b[3]

    def ln(h, g, bta):
        mu = jnp.mean(h, -1, keepdims=True)
        var = jnp.mean((h - mu) ** 2, -1, keepdims=True)
        return (h - mu) / jnp.sqrt(var + 1e-5) * g + bta

    lnp = params["ln"]
    x1 = ln(x + attn(x, x, params["w_sa"], params["b_sa"]), lnp[0], lnp[1])
    x2 = ln(x1 + attn(x1, cross, params["w_ca"], params["b_ca"]), lnp[2], lnp[3])
    y = jnp.maximum(x2 @ params["w1"] + params["b1"], 0.0) @ params["w2"] + params["b2"]
    return x2 + y


def init_params(key, d_model, d_ff):
    ks = jax.random.split(key, 4)
    scale = 0.02
    return {
        "w_sa": scale * jax.random.normal(ks[0], (4, d_model, d_model), jnp.float32),
        "b_sa": jnp.zeros((4, 1, d_model), jnp.float32),
        "w_ca": scale * jax.random.normal(ks[1], (4, d_model, d_model), jnp.float32),
        "b_ca": jnp.zeros((4, 1, d_model), jnp.float32),
        "w1": scale * jax.random.normal(ks[2], (d_model, d_ff), jnp.float32),
        "b1": 0.01 * jnp.ones((1, d_ff), jnp.float32),
        "w2": scale * jax.random.normal(ks[3], (d_ff, d_model), jnp.float32),
        "b2": 0.01 * jnp.ones((1, d_model), jnp.float32),
        # [gamma1, beta1, gamma2, beta2]
        "ln": jnp.stack([
            jnp.ones((1, d_model), jnp.float32),
            jnp.zeros((1, d_model), jnp.float32),
            jnp.ones((1, d_model), jnp.float32),
            jnp.zeros((1, d_model), jnp.float32),
        ]),
    }


if __name__ == "__main__":
    # Lane-dense (128-multiple) feature dim; small shapes for a quick check.
    B, L, S, D = 2, 128, 64, 128
    d_ff = 4 * D

    key = jax.random.PRNGKey(0)
    kx, kc, kp = jax.random.split(key, 3)
    x = jax.random.normal(kx, (B, L, D), jnp.float32)
    cross = jax.random.normal(kc, (B, S, D), jnp.float32)
    params = init_params(kp, D, d_ff)

    out, omegas_pen, thetas_pen = decoder_layer(x, cross, params)
    out = jax.block_until_ready(out)
    jax.block_until_ready(omegas_pen)
    jax.block_until_ready(thetas_pen)

    assert out.shape == (B, L, D)
    ref = decoder_layer_ref(x, cross, params)
    assert bool(jnp.all(jnp.isfinite(out)))
    # bf16 matmul operands + approximate reciprocal => moderate tolerance.
    assert bool(jnp.allclose(out, ref, atol=3e-2, rtol=3e-2)), (
        float(jnp.max(jnp.abs(out - ref))))
    print("KERNEL_OK")
</pallas_src>

<mosaic_0001>
module attributes {stable_mosaic.version = 11 : i64} {
  func.func @_split_project_kernel(%arg0: i32, %arg1: memref<1x128x128xf32, #tpu.memory_space<vmem>>, %arg2: memref<128x384xbf16, #tpu.memory_space<vmem>>, %arg3: memref<1x384xf32, #tpu.memory_space<vmem>>, %arg4: memref<1x128x128xbf16, #tpu.memory_space<vmem>>, %arg5: memref<1x128x128xbf16, #tpu.memory_space<vmem>>, %arg6: memref<1x128x128xbf16, #tpu.memory_space<vmem>>) attributes {dimension_semantics = [#tpu.dimension_semantics<parallel>], iteration_bounds = array<i64: 2>, scalar_prefetch = 0 : i64, scratch_operands = 0 : i64, tpu.core_type = #tpu.core_type<tc>, window_params = [{transform_indices = @transform_0, window_bounds = array<i64: 1, 128, 128>}, {pipeline_mode = #tpu.pipeline_mode<synchronous>, transform_indices = @transform_1, window_bounds = array<i64: 128, 384>}, {pipeline_mode = #tpu.pipeline_mode<synchronous>, transform_indices = @transform_2, window_bounds = array<i64: 1, 384>}, {transform_indices = @transform_3, window_bounds = array<i64: 1, 128, 128>}, {transform_indices = @transform_4, window_bounds = array<i64: 1, 128, 128>}, {transform_indices = @transform_5, window_bounds = array<i64: 1, 128, 128>}]} {
    %c0 = arith.constant 0 : index
    %c0_0 = arith.constant 0 : index
    %c0_1 = arith.constant 0 : index
    %0 = vector.load %arg1[%c0, %c0_0, %c0_1] : memref<1x128x128xf32, #tpu.memory_space<vmem>>, vector<1x128x128xf32>
    %1 = vector.shape_cast %0 : vector<1x128x128xf32> to vector<128x128xf32>
    %2 = arith.truncf %1 : vector<128x128xf32> to vector<128x128xbf16>
    %c0_2 = arith.constant 0 : index
    %c0_3 = arith.constant 0 : index
    %3 = vector.load %arg2[%c0_2, %c0_3] : memref<128x384xbf16, #tpu.memory_space<vmem>>, vector<128x384xbf16>
    %cst = arith.constant dense<0.000000e+00> : vector<128x384xf32>
    %4 = tpu.matmul %2, %3, %cst {dimension_numbers = #tpu.dot_dimension_numbers<[1], [0], [0], [1], [0, 0, 1, 1], [], []>} : vector<128x128xbf16>, vector<128x384xbf16>, vector<128x384xf32> -> vector<128x384xf32>
    %c0_4 = arith.constant 0 : index
    %c0_5 = arith.constant 0 : index
    %5 = vector.load %arg3[%c0_4, %c0_5] : memref<1x384xf32, #tpu.memory_space<vmem>>, vector<1x384xf32>
    %6 = vector.broadcast %5 : vector<1x384xf32> to vector<128x384xf32>
    %7 = arith.addf %4, %6 : vector<128x384xf32>
    %8 = vector.extract_strided_slice %7 {offsets = [0, 0], sizes = [128, 128], strides = [1, 1]} : vector<128x384xf32> to vector<128x128xf32>
    %9 = arith.truncf %8 : vector<128x128xf32> to vector<128x128xbf16>
    %c0_6 = arith.constant 0 : index
    %c0_7 = arith.constant 0 : index
    %c0_8 = arith.constant 0 : index
    %10 = vector.load %arg4[%c0_6, %c0_7, %c0_8] : memref<1x128x128xbf16, #tpu.memory_space<vmem>>, vector<1x128x128xbf16>
    %11 = vector.shape_cast %10 : vector<1x128x128xbf16> to vector<128x128xbf16>
    %12 = vector.shape_cast %9 : vector<128x128xbf16> to vector<1x128x128xbf16>
    tpu.vector_store %arg4[%c0_6, %c0_7, %c0_8], %12 {strides = array<i32>} : memref<1x128x128xbf16, #tpu.memory_space<vmem>>, vector<1x128x128xbf16>,
    %13 = vector.extract_strided_slice %7 {offsets = [0, 128], sizes = [128, 128], strides = [1, 1]} : vector<128x384xf32> to vector<128x128xf32>
    %14 = arith.truncf %13 : vector<128x128xf32> to vector<128x128xbf16>
    %c0_9 = arith.constant 0 : index
    %c0_10 = arith.constant 0 : index
    %c0_11 = arith.constant 0 : index
    %15 = vector.load %arg5[%c0_9, %c0_10, %c0_11] : memref<1x128x128xbf16, #tpu.memory_space<vmem>>, vector<1x128x128xbf16>
    %16 = vector.shape_cast %15 : vector<1x128x128xbf16> to vector<128x128xbf16>
    %17 = vector.shape_cast %14 : vector<128x128xbf16> to vector<1x128x128xbf16>
    tpu.vector_store %arg5[%c0_9, %c0_10, %c0_11], %17 {strides = array<i32>} : memref<1x128x128xbf16, #tpu.memory_space<vmem>>, vector<1x128x128xbf16>,
    %18 = vector.extract_strided_slice %7 {offsets = [0, 256], sizes = [128, 128], strides = [1, 1]} : vector<128x384xf32> to vector<128x128xf32>
    %19 = arith.truncf %18 : vector<128x128xf32> to vector<128x128xbf16>
    %c0_12 = arith.constant 0 : index
    %c0_13 = arith.constant 0 : index
    %c0_14 = arith.constant 0 : index
    %20 = vector.load %arg6[%c0_12, %c0_13, %c0_14] : memref<1x128x128xbf16, #tpu.memory_space<vmem>>, vector<1x128x128xbf16>
    %21 = vector.shape_cast %20 : vector<1x128x128xbf16> to vector<128x128xbf16>
    %22 = vector.shape_cast %19 : vector<128x128xbf16> to vector<1x128x128xbf16>
    tpu.vector_store %arg6[%c0_12, %c0_13, %c0_14], %22 {strides = array<i32>} : memref<1x128x128xbf16, #tpu.memory_space<vmem>>, vector<1x128x128xbf16>,
    return
  }
  func.func @transform_0(%arg0: i32) -> (i32, i32, i32) {
    %c0_i32 = arith.constant 0 : i32
    %c0_i32_0 = arith.constant 0 : i32
    %c0_i32_1 = arith.constant 0 : i32
    return %arg0, %c0_i32, %c0_i32_0 : i32, i32, i32
  }
  func.func @transform_1(%arg0: i32) -> (i32, i32) {
    %c0_i32 = arith.constant 0 : i32
    %c0_i32_0 = arith.constant 0 : i32
    %c0_i32_1 = arith.constant 0 : i32
    return %c0_i32, %c0_i32_0 : i32, i32
  }
  func.func @transform_2(%arg0: i32) -> (i32, i32) {
    %c0_i32 = arith.constant 0 : i32
    %c0_i32_0 = arith.constant 0 : i32
    %c0_i32_1 = arith.constant 0 : i32
    return %c0_i32, %c0_i32_0 : i32, i32
  }
  func.func @transform_3(%arg0: i32) -> (i32, i32, i32) {
    %c0_i32 = arith.constant 0 : i32
    %c0_i32_0 = arith.constant 0 : i32
    %c0_i32_1 = arith.constant 0 : i32
    return %arg0, %c0_i32, %c0_i32_0 : i32, i32, i32
  }
  func.func @transform_4(%arg0: i32) -> (i32, i32, i32) {
    %c0_i32 = arith.constant 0 : i32
    %c0_i32_0 = arith.constant 0 : i32
    %c0_i32_1 = arith.constant 0 : i32
    return %arg0, %c0_i32, %c0_i32_0 : i32, i32, i32
  }
  func.func @transform_5(%arg0: i32) -> (i32, i32, i32) {
    %c0_i32 = arith.constant 0 : i32
    %c0_i32_0 = arith.constant 0 : i32
    %c0_i32_1 = arith.constant 0 : i32
    return %arg0, %c0_i32, %c0_i32_0 : i32, i32, i32
  }
}

</mosaic_0001>

<llo_original>
// kernel: tpu_custom_call.1
$region0: #{tpu_custom_call.1}
  #allocation0 [shape = 'u32[]', space=smem, size = 0x4, offset = 0x4, fixed_abs, tag = 'smem constant byte address 0x4 - core index']
  #allocation1 [shape = 'u32[144,128]{1,0:T(1,128)}', space=vmem, size = 0x12000, scoped, tag = 'internal scratch']
  %s0 = inlined_call_operand.hbm [shape: f32[2,128,128], index: 0, kind: input, shape index: {}]
  %s1 = inlined_call_operand.hbm [shape: bf16[128,384], index: 1, kind: input, shape index: {}]
  %s2 = inlined_call_operand.vmem [shape: f32[1,384], index: 2, kind: input, shape index: {}]
  %s3 = inlined_call_operand.hbm [shape: bf16[2,128,128], index: 3, kind: output, shape index: {0}]
  %s4 = inlined_call_operand.hbm [shape: bf16[2,128,128], index: 4, kind: output, shape index: {1}]
  %s5 = inlined_call_operand.hbm [shape: bf16[2,128,128], index: 5, kind: output, shape index: {2}]
  %6 = xla_tuple %s3, %s4, %s5
  %s7 = sld [smem:[#allocation0]]
  $region69: #{tpu_custom_call.1} parent=0
    _
  %s9 = ssub.s32 1, %s7
  %s10 = scalar_select 0, %s9, %s7
  $region1: #{tpu_custom_call.1} parent=0
    #allocation2 [shape = 'u8[131072]{0}', space=vmem, size = 0x20000, scoped, tag = 'input window, operand 0']
    #allocation3 [shape = 's32[2]{0}', space=sflag, size = 0x8, scoped, tag = 'scoped memory for tpu_custom_call.1']
    #allocation4 [shape = 's32[2]{0}', space=sflag, size = 0x8, scoped, tag = 'scoped memory for tpu_custom_call.1']
    #allocation5 [shape = 'u8[98304]{0}', space=vmem, size = 0x18000, scoped, tag = 'input window, operand 1, single buffered']
    #allocation6 [shape = 's32[1]{0}', space=sflag, size = 0x4, scoped, tag = 'scoped memory for tpu_custom_call.1']
    #allocation7 [shape = 'u8[65536]{0}', space=vmem, size = 0x10000, scoped, tag = 'output window, operand 0']
    #allocation8 [shape = 'u8[65536]{0}', space=vmem, size = 0x10000, scoped, tag = 'output window, operand 1']
    #allocation9 [shape = 's32[2]{0}', space=sflag, size = 0x8, scoped, tag = 'scoped memory for tpu_custom_call.1']
    #allocation10 [shape = 'u8[65536]{0}', space=vmem, size = 0x10000, scoped, tag = 'output window, operand 2']
    %11 = vsyncpa [#allocation3], 0
    %s12 = scalar_lea.sflag [#allocation3], 1
    %13 = vsyncpa %s12, 0
    %14 = vsyncpa [#allocation6], 0
    %15 = vsyncpa [#allocation4], 0
    %s16 = scalar_lea.sflag [#allocation4], 1
    %17 = vsyncpa %s16, 0
    %18 = vsyncpa [#allocation9], 0
    %s19 = scalar_lea.sflag [#allocation9], 1
    %20 = vsyncpa %s19, 0
    loop: start=0, step=1, limit=4
    $region2: #{tpu_custom_call.1} parent=1 // loop_pre_header
      _
    $region3: #{tpu_custom_call.1} parent=1 // loop_header
      %s22 = sphi 0, %s26
      %p23 = scmp.ge.s32.totalorder %s22, 4
      %s32 = sphi 0, %s34
      %s35 = sphi 0, %s32
      %s36 = sphi 0, %s35
      %s52 = sphi 0, %s36
      %s56 = sphi 0, %s56
      %s58 = sphi 0, %s56
      %s59 = sphi 0, %s58
      %s73 = sphi 0, %s59
      %s77 = sphi 0, %s77
      %s79 = sphi 0, %s77
      %s80 = sphi 0, %s79
      %s94 = sphi 0, %s80
      %s100 = sphi 0, %s102
      %s103 = sphi 0, %s100
      %s104 = sphi 0, %s103
      %s120 = sphi 0, %s104
      %s126 = sphi 0, %s128
      %s129 = sphi 0, %s126
      %s130 = sphi 0, %s129
      %s146 = sphi 0, %s130
      %s152 = sphi 0, %s154
      %s155 = sphi 0, %s152
      %s156 = sphi 0, %s155
      %s172 = sphi 0, %s156
    $region4: #{tpu_custom_call.1} parent=1 // loop_header_branch
      %25 = sbr.rel (%p23) target = $region8
    $region5: #{tpu_custom_call.1} parent=1 // loop_body
      %s27 = ssub.s32 %s22, 1
      %s28 = ssub.s32 %s22, 2
      %s29 = sadd.s32 %s22, 1
      %s30 = ssub.s32 %s22, %s29
      %p31 = scmp.eq.s32.totalorder %s30, 0
      %s33 = sadd.s32 %s32, 1
      %s34 = scalar_select %p31, %s32, %s33
      %p37 = pneg %p31
      %p38 = scmp.eq.s32.totalorder %s22, 1
      %p39 = por %p37, %p38
      %p40 = scmp.ne.s32.totalorder %s32, %s35
      %p41 = scmp.eq.s32.totalorder %s22, 0
      %p42 = por %p40, %p41
      %p43 = scmp.ne.s32.totalorder %s32, %s35
      %p44 = scmp.eq.s32.totalorder %s27, 1
      %p45 = por %p43, %p44
      %p46 = scmp.ne.s32.totalorder %s35, %s36
      %p47 = scmp.eq.s32.totalorder %s27, 0
      %p48 = por %p46, %p47
      %p49 = scmp.ne.s32.totalorder %s35, %s36
      %p50 = scmp.eq.s32.totalorder %s28, 1
      %p51 = por %p49, %p50
      %p53 = scmp.ne.s32.totalorder %s36, %s52
      %p54 = scmp.eq.s32.totalorder %s28, 0
      %p55 = por %p53, %p54
      %s57 = sadd.s32 %s56, 1
      %p60 = scmp.eq.s32.totalorder %s22, 1
      %p61 = scmp.ne.s32.totalorder %s56, %s58
      %p62 = scmp.eq.s32.totalorder %s22, 0
      %p63 = por %p61, %p62
      %p64 = scmp.ne.s32.totalorder %s56, %s58
      %p65 = scmp.eq.s32.totalorder %s27, 1
      %p66 = por %p64, %p65
      %p67 = scmp.ne.s32.totalorder %s58, %s59
      %p68 = scmp.eq.s32.totalorder %s27, 0
      %p69 = por %p67, %p68
      %p70 = scmp.ne.s32.totalorder %s58, %s59
      %p71 = scmp.eq.s32.totalorder %s28, 1
      %p72 = por %p70, %p71
      %p74 = scmp.ne.s32.totalorder %s59, %s73
      %p75 = scmp.eq.s32.totalorder %s28, 0
      %p76 = por %p74, %p75
      %s78 = sadd.s32 %s77, 1
      %p81 = scmp.eq.s32.totalorder %s22, 1
      %p82 = scmp.ne.s32.totalorder %s77, %s79
      %p83 = scmp.eq.s32.totalorder %s22, 0
      %p84 = por %p82, %p83
      %p85 = scmp.ne.s32.totalorder %s77, %s79
      %p86 = scmp.eq.s32.totalorder %s27, 1
      %p87 = por %p85, %p86
      %p88 = scmp.ne.s32.totalorder %s79, %s80
      %p89 = scmp.eq.s32.totalorder %s27, 0
      %p90 = por %p88, %p89
      %p91 = scmp.ne.s32.totalorder %s79, %s80
      %p92 = scmp.eq.s32.totalorder %s28, 1
      %p93 = por %p91, %p92
      %p95 = scmp.ne.s32.totalorder %s80, %s94
      %p96 = scmp.eq.s32.totalorder %s28, 0
      %p97 = por %p95, %p96
      %s98 = ssub.s32 %s22, %s29
      %p99 = scmp.eq.s32.totalorder %s98, 0
      %s101 = sadd.s32 %s100, 1
      %s102 = scalar_select %p99, %s100, %s101
      %p105 = pneg %p99
      %p106 = scmp.eq.s32.totalorder %s22, 1
      %p107 = por %p105, %p106
      %p108 = scmp.ne.s32.totalorder %s100, %s103
      %p109 = scmp.eq.s32.totalorder %s22, 0
      %p110 = por %p108, %p109
      %p111 = scmp.ne.s32.totalorder %s100, %s103
      %p112 = scmp.eq.s32.totalorder %s27, 1
      %p113 = por %p111, %p112
      %p114 = scmp.ne.s32.totalorder %s103, %s104
      %p115 = scmp.eq.s32.totalorder %s27, 0
      %p116 = por %p114, %p115
      %p117 = scmp.ne.s32.totalorder %s103, %s104
      %p118 = scmp.eq.s32.totalorder %s28, 1
      %p119 = por %p117, %p118
      %p121 = scmp.ne.s32.totalorder %s104, %s120
      %p122 = scmp.eq.s32.totalorder %s28, 0
      %p123 = por %p121, %p122
      %s124 = ssub.s32 %s22, %s29
      %p125 = scmp.eq.s32.totalorder %s124, 0
      %s127 = sadd.s32 %s126, 1
      %s128 = scalar_select %p125, %s126, %s127
      %p131 = pneg %p125
      %p132 = scmp.eq.s32.totalorder %s22, 1
      %p133 = por %p131, %p132
      %p134 = scmp.ne.s32.totalorder %s126, %s129
      %p135 = scmp.eq.s32.totalorder %s22, 0
      %p136 = por %p134, %p135
      %p137 = scmp.ne.s32.totalorder %s126, %s129
      %p138 = scmp.eq.s32.totalorder %s27, 1
      %p139 = por %p137, %p138
      %p140 = scmp.ne.s32.totalorder %s129, %s130
      %p141 = scmp.eq.s32.totalorder %s27, 0
      %p142 = por %p140, %p141
      %p143 = scmp.ne.s32.totalorder %s129, %s130
      %p144 = scmp.eq.s32.totalorder %s28, 1
      %p145 = por %p143, %p144
      %p147 = scmp.ne.s32.totalorder %s130, %s146
      %p148 = scmp.eq.s32.totalorder %s28, 0
      %p149 = por %p147, %p148
      %s150 = ssub.s32 %s22, %s29
      %p151 = scmp.eq.s32.totalorder %s150, 0
      %s153 = sadd.s32 %s152, 1
      %s154 = scalar_select %p151, %s152, %s153
      %p157 = pneg %p151
      %p158 = scmp.eq.s32.totalorder %s22, 1
      %p159 = por %p157, %p158
      %p160 = scmp.ne.s32.totalorder %s152, %s155
      %p161 = scmp.eq.s32.totalorder %s22, 0
      %p162 = por %p160, %p161
      %p163 = scmp.ne.s32.totalorder %s152, %s155
      %p164 = scmp.eq.s32.totalorder %s27, 1
      %p165 = por %p163, %p164
      %p166 = scmp.ne.s32.totalorder %s155, %s156
      %p167 = scmp.eq.s32.totalorder %s27, 0
      %p168 = por %p166, %p167
      %p169 = scmp.ne.s32.totalorder %s155, %s156
      %p170 = scmp.eq.s32.totalorder %s28, 1
      %p171 = por %p169, %p170
      %p173 = scmp.ne.s32.totalorder %s156, %s172
      %p174 = scmp.eq.s32.totalorder %s28, 0
      %p175 = por %p173, %p174
      %p176 = scmp.le.s32.totalorder 1, %s22
      %p177 = scmp.lt.s32.totalorder %s22, 3
      %p178 = pnand %p176, %p177
      %p179 = pneg %p178
      // Predicated region
      $region9: #{tpu_custom_call.1} parent=5 // pred_check
        _
      $region10: #{tpu_custom_call.1} parent=5 // pred_check_branch
        %181 = sbr.rel (%p178) target = $region12
      $region11: #{tpu_custom_call.1} parent=5 // pred_region
        %s182 = ssub.s32 %s22, 1
        // Predicated region
        $region13: #{tpu_custom_call.1} parent=11 // pred_check
          %p183 = pneg %p69
        $region14: #{tpu_custom_call.1} parent=11 // pred_check_branch
          %185 = sbr.rel (%p183) target = $region16
        $region15: #{tpu_custom_call.1} parent=11 // pred_region
          %s187 = ssub.s32 3072, 3072
          %188 = vsyncadd [#allocation6], %s187
          %s189 = sshll.u32 [#allocation5], 4
          %s190 = int_to_ptr.vmem [resolvable:$true] %s189
          %195 = dma.hbm_to_vmem [thread:$0]  %s1, 3072, %s190, [#allocation6], 192, 192, 12
        $region16: #{tpu_custom_call.1} parent=11 // pred_fallthru
          _
        // Predicated region
        $region17: #{tpu_custom_call.1} parent=11 // pred_check
          %p196 = pneg %p90
        $region18: #{tpu_custom_call.1} parent=11 // pred_check_branch
          %198 = sbr.rel (%p196) target = $region20
        $region19: #{tpu_custom_call.1} parent=11 // pred_region
          _
        $region20: #{tpu_custom_call.1} parent=11 // pred_fallthru
          _
      $region12: #{tpu_custom_call.1} parent=5 // pred_fallthru
        _
      %p199 = scmp.lt.s32.totalorder %s22, 2
      // Predicated region
      $region21: #{tpu_custom_call.1} parent=5 // pred_check
        %p200 = pneg %p199
      $region22: #{tpu_custom_call.1} parent=5 // pred_check_branch
        %202 = sbr.rel (%p200) target = $region24
      $region23: #{tpu_custom_call.1} parent=5 // pred_region
        // Predicated region
        $region25: #{tpu_custom_call.1} parent=23 // pred_check
          %p203 = pneg %p42
        $region26: #{tpu_custom_call.1} parent=23 // pred_check_branch
          %205 = sbr.rel (%p203) target = $region28
        $region27: #{tpu_custom_call.1} parent=23 // pred_region
          %s206 = sand.u32 %s32, 1
          %s207 = scalar_lea.sflag [#allocation3], %s206
          %s208 = sand.u32 %s32, 1
          %s209 = smul.addr %s208, 128
          %s210 = scalar_lea.vmem [#allocation2], %s209
          %s212 = ssub.s32 2048, 2048
          %213 = vsyncadd %s207, %s212
          %s214 = smul.addr %s22, 16
          %s215 = smul.addr %s214, 128
          %s216 = scalar_lea.hbm %s0, %s215
          %s217 = sshll.u32 %s210, 4
          %s218 = int_to_ptr.vmem [resolvable:$true] %s217
          %223 = dma.hbm_to_vmem [thread:$0]  %s216, 2048, %s218, %s207, 128, 128, 8
        $region28: #{tpu_custom_call.1} parent=23 // pred_fallthru
          _
      $region24: #{tpu_custom_call.1} parent=5 // pred_fallthru
        _
      %p224 = scmp.le.s32.totalorder 1, %s22
      %p225 = scmp.lt.s32.totalorder %s22, 3
      %p226 = pnand %p224, %p225
      %p227 = pneg %p226
      // Predicated region
      $region29: #{tpu_custom_call.1} parent=5 // pred_check
        _
      $region30: #{tpu_custom_call.1} parent=5 // pred_check_branch
        %229 = sbr.rel (%p226) target = $region32
      $region31: #{tpu_custom_call.1} parent=5 // pred_region
        %s230 = ssub.s32 %s22, 1
        %s231 = sand.u32 %s35, 1
        %s232 = scalar_lea.sflag [#allocation3], %s231
        %s233 = sand.u32 %s35, 1
        %s234 = smul.addr %s233, 128
        %s235 = scalar_lea.vmem [#allocation2], %s234
        // Predicated region
        $region33: #{tpu_custom_call.1} parent=31 // pred_check
          %p236 = pneg %p48
        $region34: #{tpu_custom_call.1} parent=31 // pred_check_branch
          %238 = sbr.rel (%p236) target = $region36
        $region35: #{tpu_custom_call.1} parent=31 // pred_region
          %239 = dma.done %s232, 2048
        $region36: #{tpu_custom_call.1} parent=31 // pred_fallthru
          _
        // Predicated region
        $region37: #{tpu_custom_call.1} parent=31 // pred_check
          %p240 = pneg %p69
        $region38: #{tpu_custom_call.1} parent=31 // pred_check_branch
          %242 = sbr.rel (%p240) target = $region40
        $region39: #{tpu_custom_call.1} parent=31 // pred_region
          %243 = dma.done [#allocation6], 3072
        $region40: #{tpu_custom_call.1} parent=31 // pred_fallthru
          _
        %s244 = sand.u32 %s35, 1
        %s245 = scalar_lea.sflag [#allocation3], %s244
        %s246 = sand.u32 %s35, 1
        %s247 = smul.addr %s246, 128
        %s248 = scalar_lea.vmem [#allocation2], %s247
        %p249 = pneg %p48
        %p250 = pneg %p45
        %p251 = pneg %p69
        %p252 = pneg %p66
        %p253 = pneg %p90
        %p254 = pneg %p87
        %p255 = pneg %p116
        %p256 = pneg %p113
        %s257 = sand.u32 %s103, 1
        %s258 = scalar_lea.sflag [#allocation4], %s257
        %s259 = sand.u32 %s103, 1
        %s260 = smul.addr %s259, 64
        %s261 = scalar_lea.vmem [#allocation7], %s260
        %p262 = pneg %p142
        %p263 = pneg %p139
        %s264 = sand.u32 %s27, 1
        %s265 = scalar_lea.sflag [#allocation9], %s264
        %s266 = sand.u32 %s129, 1
        %s267 = smul.addr %s266, 64
        %s268 = scalar_lea.vmem [#allocation8], %s267
        %p269 = pneg %p168
        %p270 = pneg %p165
        %s271 = sand.u32 %s27, 1
        %s272 = scalar_lea.sflag [#allocation9], %s271
        %s273 = sand.u32 %s155, 1
        %s274 = smul.addr %s273, 64
        %s275 = scalar_lea.vmem [#allocation10], %s274
        %v277 = vld [vmem:[%s235] sm:$0xff]
        %v278 = vld [vmem:[%s235 + $0x8] sm:$0xff]
        %v279 = vld [vmem:[%s235 + $0x10] sm:$0xff]
        %v280 = vld [vmem:[%s235 + $0x18] sm:$0xff]
        %v281 = vld [vmem:[%s235 + $0x20] sm:$0xff]
        %v282 = vld [vmem:[%s235 + $0x28] sm:$0xff]
        %v283 = vld [vmem:[%s235 + $0x30] sm:$0xff]
        %v284 = vld [vmem:[%s235 + $0x38] sm:$0xff]
        %v285 = vld [vmem:[%s235 + $0x40] sm:$0xff]
        %v286 = vld [vmem:[%s235 + $0x48] sm:$0xff]
        %v287 = vld [vmem:[%s235 + $0x50] sm:$0xff]
        %v288 = vld [vmem:[%s235 + $0x58] sm:$0xff]
        %v289 = vld [vmem:[%s235 + $0x60] sm:$0xff]
        %v290 = vld [vmem:[%s235 + $0x68] sm:$0xff]
        %v291 = vld [vmem:[%s235 + $0x70] sm:$0xff]
        %v292 = vld [vmem:[%s235 + $0x78] sm:$0xff]
        %v293 = vpack.c.bf16 %v278, %v277
        %v294 = vpack.c.bf16 %v280, %v279
        %v295 = vpack.c.bf16 %v282, %v281
        %v296 = vpack.c.bf16 %v284, %v283
        %v297 = vpack.c.bf16 %v286, %v285
        %v298 = vpack.c.bf16 %v288, %v287
        %v299 = vpack.c.bf16 %v290, %v289
        %v300 = vpack.c.bf16 %v292, %v291
        %v301 = vld [vmem:[#allocation5] sm:$0xff]
        %v302 = vld [vmem:[#allocation5 + $0x8] sm:$0xf]
        %v303 = vld [vmem:[#allocation5 + $0xc] sm:$0xff]
        %v304 = vld [vmem:[#allocation5 + $0x14] sm:$0xf]
        %v305 = vld [vmem:[#allocation5 + $0x18] sm:$0xff]
        %v306 = vld [vmem:[#allocation5 + $0x20] sm:$0xf]
        %v307 = vld [vmem:[#allocation5 + $0x24] sm:$0xff]
        %v308 = vld [vmem:[#allocation5 + $0x2c] sm:$0xf]
        %v309 = vld [vmem:[#allocation5 + $0x30] sm:$0xff]
        %v310 = vld [vmem:[#allocation5 + $0x38] sm:$0xf]
        %v311 = vld [vmem:[#allocation5 + $0x3c] sm:$0xff]
        %v312 = vld [vmem:[#allocation5 + $0x44] sm:$0xf]
        %v313 = vld [vmem:[#allocation5 + $0x48] sm:$0xff]
        %v314 = vld [vmem:[#allocation5 + $0x50] sm:$0xf]
        %v315 = vld [vmem:[#allocation5 + $0x54] sm:$0xff]
        %v316 = vld [vmem:[#allocation5 + $0x5c] sm:$0xf]
        %v317 = vld [vmem:[#allocation5 + $0x60] sm:$0xff]
        %v318 = vld [vmem:[#allocation5 + $0x68] sm:$0xf]
        %v319 = vld [vmem:[#allocation5 + $0x6c] sm:$0xff]
        %v320 = vld [vmem:[#allocation5 + $0x74] sm:$0xf]
        %v321 = vld [vmem:[#allocation5 + $0x78] sm:$0xff]
        %v322 = vld [vmem:[#allocation5 + $0x80] sm:$0xf]
        %v323 = vld [vmem:[#allocation5 + $0x84] sm:$0xff]
        %v324 = vld [vmem:[#allocation5 + $0x8c] sm:$0xf]
        %v325 = vld [vmem:[#allocation5 + $0x90] sm:$0xff]
        %v326 = vld [vmem:[#allocation5 + $0x98] sm:$0xf]
        %v327 = vld [vmem:[#allocation5 + $0x9c] sm:$0xff]
        %v328 = vld [vmem:[#allocation5 + $0xa4] sm:$0xf]
        %v329 = vld [vmem:[#allocation5 + $0xa8] sm:$0xff]
        %v330 = vld [vmem:[#allocation5 + $0xb0] sm:$0xf]
        %v331 = vld [vmem:[#allocation5 + $0xb4] sm:$0xff]
        %v332 = vld [vmem:[#allocation5 + $0xbc] sm:$0xf]
        %v333 = vld [vmem:[%s2] sm:$0x7]
        %v335 = vlaneseq
        %v336 = vshrl.u32 %v335, 7
        %v337 = vsub.s32 0, %v336
        %v338 = vrot.slane %v333, %v337
        %v339 = vlaneseq
        %v340 = vshrl.u32 %v339, 7
        %v341 = vsub.s32 1, %v340
        %v342 = vrot.slane %v333, %v341
        %v343 = vlaneseq
        %v344 = vshrl.u32 %v343, 7
        %v345 = vsub.s32 2, %v344
        %v346 = vrot.slane %v333, %v345
        %v382 = vunpack.c.l.b16 %v301
        %v383 = vunpack.c.h.b16 %v301
        %v384 = vunpack.c.l.b16 %v302
        %v385 = vunpack.c.l.b16 %v303
        %v386 = vunpack.c.h.b16 %v303
        %v387 = vunpack.c.l.b16 %v304
        %v388 = vunpack.c.l.b16 %v305
        %v389 = vunpack.c.h.b16 %v305
        %v390 = vunpack.c.l.b16 %v306
        %v391 = vunpack.c.l.b16 %v307
        %v392 = vunpack.c.h.b16 %v307
        %v393 = vunpack.c.l.b16 %v308
        %v394 = vunpack.c.l.b16 %v309
        %v395 = vunpack.c.h.b16 %v309
        %v396 = vunpack.c.l.b16 %v310
        %v397 = vunpack.c.l.b16 %v311
        %v398 = vunpack.c.h.b16 %v311
        %v399 = vunpack.c.l.b16 %v312
        %v400 = vunpack.c.l.b16 %v313
        %v401 = vunpack.c.h.b16 %v313
        %v402 = vunpack.c.l.b16 %v314
        %v403 = vunpack.c.l.b16 %v315
        %v404 = vunpack.c.h.b16 %v315
        %v405 = vunpack.c.l.b16 %v316
        %v406 = vunpack.c.l.b16 %v317
        %v407 = vunpack.c.h.b16 %v317
        %v408 = vunpack.c.l.b16 %v318
        %v409 = vunpack.c.l.b16 %v319
        %v410 = vunpack.c.h.b16 %v319
        %v411 = vunpack.c.l.b16 %v320
        %v412 = vunpack.c.l.b16 %v321
        %v413 = vunpack.c.h.b16 %v321
        %v414 = vunpack.c.l.b16 %v322
        %v415 = vunpack.c.l.b16 %v323
        %v416 = vunpack.c.h.b16 %v323
        %v417 = vunpack.c.l.b16 %v324
        %v418 = vunpack.c.l.b16 %v325
        %v419 = vunpack.c.h.b16 %v325
        %v420 = vunpack.c.l.b16 %v326
        %v421 = vunpack.c.l.b16 %v327
        %v422 = vunpack.c.h.b16 %v327
        %v423 = vunpack.c.l.b16 %v328
        %v424 = vunpack.c.l.b16 %v329
        %v425 = vunpack.c.h.b16 %v329
        %v426 = vunpack.c.l.b16 %v330
        %v427 = vunpack.c.l.b16 %v331
        %v428 = vunpack.c.h.b16 %v331
        %v429 = vunpack.c.l.b16 %v332
        %v430 = vpack.c.b16 %v385, %v382
        %v431 = vpack.c.b16 %v386, %v383
        %v432 = vpack.c.b16 %v387, %v384
        %v433 = vpack.c.b16 %v391, %v388
        %v434 = vpack.c.b16 %v392, %v389
        %v435 = vpack.c.b16 %v393, %v390
        %v436 = vpack.c.b16 %v397, %v394
        %v437 = vpack.c.b16 %v398, %v395
        %v438 = vpack.c.b16 %v399, %v396
        %v439 = vpack.c.b16 %v403, %v400
        %v440 = vpack.c.b16 %v404, %v401
        %v441 = vpack.c.b16 %v405, %v402
        %v442 = vpack.c.b16 %v409, %v406
        %v443 = vpack.c.b16 %v410, %v407
        %v444 = vpack.c.b16 %v411, %v408
        %v445 = vpack.c.b16 %v415, %v412
        %v446 = vpack.c.b16 %v416, %v413
        %v447 = vpack.c.b16 %v417, %v414
        %v448 = vpack.c.b16 %v421, %v418
        %v449 = vpack.c.b16 %v422, %v419
        %v450 = vpack.c.b16 %v423, %v420
        %v451 = vpack.c.b16 %v427, %v424
        %v452 = vpack.c.b16 %v428, %v425
        %v453 = vpack.c.b16 %v429, %v426
        %478 = vmatprep.subr.bf16.mxu0 %v431
        %479 = vmatpush1.bf16.msra.mxu0 %v430
        %480 = vmatprep.subr.bf16.mxu0 %v434
        %481 = vmatpush1.bf16.msra.mxu0 %v433
        %482 = vmatprep.subr.bf16.mxu0 %v437
        %483 = vmatpush1.bf16.msra.mxu0 %v436
        %484 = vmatprep.subr.bf16.mxu0 %v440
        %485 = vmatpush1.bf16.msra.mxu0 %v439
        %486 = vmatprep.subr.bf16.mxu0 %v443
        %487 = vmatpush1.bf16.msra.mxu0 %v442
        %488 = vmatprep.subr.bf16.mxu0 %v446
        %489 = vmatpush1.bf16.msra.mxu0 %v445
        %490 = vmatprep.subr.bf16.mxu0 %v449
        %491 = vmatpush1.bf16.msra.mxu0 %v448
        %492 = vmatprep.subr.bf16.mxu0 %v452
        %493 = vmatpush1.bf16.msra.mxu0 %v451
        %494 = vmatprep.subr.bf16.mxu0 0
        %495 = vmatpush1.bf16.msra.mxu0 0
        %496 = vmatprep.subr.bf16.mxu0 0
        %497 = vmatpush1.bf16.msra.mxu0 0
        %498 = vmatprep.subr.bf16.mxu0 0
        %499 = vmatpush1.bf16.msra.mxu0 0
        %500 = vmatprep.subr.bf16.mxu0 0
        %501 = vmatpush1.bf16.msra.mxu0 0
        %502 = vmatprep.subr.bf16.mxu0 0
        %503 = vmatpush1.bf16.msra.mxu0 0
        %504 = vmatprep.subr.bf16.mxu0 0
        %505 = vmatpush1.bf16.msra.mxu0 0
        %506 = vmatprep.subr.bf16.mxu0 0
        %507 = vmatpush1.bf16.msra.mxu0 0
        %508 = vmatprep.subr.bf16.mxu0 0
        %509 = vmatpush1.bf16.msra.mxu0 0
        %510 = vmatprep.mubr.bf16.mxu0 0
        %511 = vmatmul.mubr.bf16.gmra.mrb[0].mxu0 %v293
        %v512 = vpop.f32.mrb[0].mxu0
        %v513 = vadd.f32 %v338, %v512
        %v514 = vpop.f32.mrb[0].mxu0
        %v515 = vadd.f32 %v342, %v514
        %v516 = vpop.f32.mrb[0].mxu0
        %v517 = vadd.f32 %v338, %v516
        %v518 = vpop.f32.mrb[0].mxu0
        %v519 = vadd.f32 %v342, %v518
        %520 = vmatprep.mubr.bf16.mxu0 0
        %521 = vmatmul.mubr.bf16.gmra.mrb[0].mxu0 %v294
        %v522 = vpop.f32.mrb[0].mxu0
        %v523 = vadd.f32 %v338, %v522
        %v524 = vpop.f32.mrb[0].mxu0
        %v525 = vadd.f32 %v342, %v524
        %v526 = vpop.f32.mrb[0].mxu0
        %v527 = vadd.f32 %v338, %v526
        %v528 = vpop.f32.mrb[0].mxu0
        %v529 = vadd.f32 %v342, %v528
        %530 = vmatprep.mubr.bf16.mxu0 0
        %531 = vmatmul.mubr.bf16.gmra.mrb[0].mxu0 %v295
        %v532 = vpop.f32.mrb[0].mxu0
        %v533 = vadd.f32 %v338, %v532
        %v534 = vpop.f32.mrb[0].mxu0
        %v535 = vadd.f32 %v342, %v534
        %v536 = vpop.f32.mrb[0].mxu0
        %v537 = vadd.f32 %v338, %v536
        %v538 = vpop.f32.mrb[0].mxu0
        %v539 = vadd.f32 %v342, %v538
        %540 = vmatprep.mubr.bf16.mxu0 0
        %541 = vmatmul.mubr.bf16.gmra.mrb[0].mxu0 %v296
        %v542 = vpop.f32.mrb[0].mxu0
        %v543 = vadd.f32 %v338, %v542
        %v544 = vpop.f32.mrb[0].mxu0
        %v545 = vadd.f32 %v342, %v544
        %v546 = vpop.f32.mrb[0].mxu0
        %v547 = vadd.f32 %v338, %v546
        %v548 = vpop.f32.mrb[0].mxu0
        %v549 = vadd.f32 %v342, %v548
        %550 = vmatprep.mubr.bf16.mxu0 0
        %551 = vmatmul.mubr.bf16.gmra.mrb[0].mxu0 %v297
        %v552 = vpop.f32.mrb[0].mxu0
        %v553 = vadd.f32 %v338, %v552
        %v554 = vpop.f32.mrb[0].mxu0
        %v555 = vadd.f32 %v342, %v554
        %v556 = vpop.f32.mrb[0].mxu0
        %v557 = vadd.f32 %v338, %v556
        %v558 = vpop.f32.mrb[0].mxu0
        %v559 = vadd.f32 %v342, %v558
        %560 = vmatprep.mubr.bf16.mxu0 0
        %561 = vmatmul.mubr.bf16.gmra.mrb[0].mxu0 %v298
        %v562 = vpop.f32.mrb[0].mxu0
        %v563 = vadd.f32 %v338, %v562
        %v564 = vpop.f32.mrb[0].mxu0
        %v565 = vadd.f32 %v342, %v564
        %v566 = vpop.f32.mrb[0].mxu0
        %v567 = vadd.f32 %v338, %v566
        %v568 = vpop.f32.mrb[0].mxu0
        %v569 = vadd.f32 %v342, %v568
        %570 = vmatprep.mubr.bf16.mxu0 0
        %571 = vmatmul.mubr.bf16.gmra.mrb[0].mxu0 %v299
        %v572 = vpop.f32.mrb[0].mxu0
        %v573 = vadd.f32 %v338, %v572
        %v574 = vpop.f32.mrb[0].mxu0
        %v575 = vadd.f32 %v342, %v574
        %v576 = vpop.f32.mrb[0].mxu0
        %v577 = vadd.f32 %v338, %v576
        %v578 = vpop.f32.mrb[0].mxu0
        %v579 = vadd.f32 %v342, %v578
        %580 = vmatprep.mubr.bf16.mxu0 0
        %581 = vmatmul.mubr.bf16.gmra.mrb[0].mxu0 %v300
        %v582 = vpop.f32.mrb[0].mxu0
        %v583 = vadd.f32 %v338, %v582
        %v584 = vpop.f32.mrb[0].mxu0
        %v585 = vadd.f32 %v342, %v584
        %v586 = vpop.f32.mrb[0].mxu0
        %v587 = vadd.f32 %v338, %v586
        %v588 = vpop.f32.mrb[0].mxu0
        %v589 = vadd.f32 %v342, %v588
        %590 = vdwg.mxu0
        %591 = vmatprep.subr.bf16.mxu0 0
        %592 = vmatpush1.bf16.msra.mxu0 %v432
        %593 = vmatprep.subr.bf16.mxu0 0
        %594 = vmatpush1.bf16.msra.mxu0 %v435
        %595 = vmatprep.subr.bf16.mxu0 0
        %596 = vmatpush1.bf16.msra.mxu0 %v438
        %597 = vmatprep.subr.bf16.mxu0 0
        %598 = vmatpush1.bf16.msra.mxu0 %v441
        %599 = vmatprep.subr.bf16.mxu0 0
        %600 = vmatpush1.bf16.msra.mxu0 %v444
        %601 = vmatprep.subr.bf16.mxu0 0
        %602 = vmatpush1.bf16.msra.mxu0 %v447
        %603 = vmatprep.subr.bf16.mxu0 0
        %604 = vmatpush1.bf16.msra.mxu0 %v450
        %605 = vmatprep.subr.bf16.mxu0 0
        %606 = vmatpush1.bf16.msra.mxu0 %v453
        %607 = vmatprep.subr.bf16.mxu0 0
        %608 = vmatpush1.bf16.msra.mxu0 0
        %609 = vmatprep.subr.bf16.mxu0 0
        %610 = vmatpush1.bf16.msra.mxu0 0
        %611 = vmatprep.subr.bf16.mxu0 0
        %612 = vmatpush1.bf16.msra.mxu0 0
        %613 = vmatprep.subr.bf16.mxu0 0
        %614 = vmatpush1.bf16.msra.mxu0 0
        %615 = vmatprep.subr.bf16.mxu0 0
        %616 = vmatpush1.bf16.msra.mxu0 0
        %617 = vmatprep.subr.bf16.mxu0 0
        %618 = vmatpush1.bf16.msra.mxu0 0
        %619 = vmatprep.subr.bf16.mxu0 0
        %620 = vmatpush1.bf16.msra.mxu0 0
        %621 = vmatprep.subr.bf16.mxu0 0
        %622 = vmatpush1.bf16.msra.mxu0 0
        %623 = vmatprep.mubr.bf16.mxu0 0
        %624 = vmatmul.mubr.bf16.gmra.mrb[0].mxu0 %v293
        %v625 = vpop.f32.mrb[0].mxu0
        %v626 = vadd.f32 %v346, %v625
        %v627 = vpop.f32.mrb[0].mxu0
        %v628 = vpop.f32.mrb[0].mxu0
        %v629 = vadd.f32 %v346, %v628
        %v630 = vpop.f32.mrb[0].mxu0
        %631 = vmatprep.mubr.bf16.mxu0 0
        %632 = vmatmul.mubr.bf16.gmra.mrb[0].mxu0 %v294
        %v633 = vpop.f32.mrb[0].mxu0
        %v634 = vadd.f32 %v346, %v633
        %v635 = vpop.f32.mrb[0].mxu0
        %v636 = vpop.f32.mrb[0].mxu0
        %v637 = vadd.f32 %v346, %v636
        %v638 = vpop.f32.mrb[0].mxu0
        %639 = vmatprep.mubr.bf16.mxu0 0
        %640 = vmatmul.mubr.bf16.gmra.mrb[0].mxu0 %v295
        %v641 = vpop.f32.mrb[0].mxu0
        %v642 = vadd.f32 %v346, %v641
        %v643 = vpop.f32.mrb[0].mxu0
        %v644 = vpop.f32.mrb[0].mxu0
        %v645 = vadd.f32 %v346, %v644
        %v646 = vpop.f32.mrb[0].mxu0
        %647 = vmatprep.mubr.bf16.mxu0 0
        %648 = vmatmul.mubr.bf16.gmra.mrb[0].mxu0 %v296
        %v649 = vpop.f32.mrb[0].mxu0
        %v650 = vadd.f32 %v346, %v649
        %v651 = vpop.f32.mrb[0].mxu0
        %v652 = vpop.f32.mrb[0].mxu0
        %v653 = vadd.f32 %v346, %v652
        %v654 = vpop.f32.mrb[0].mxu0
        %655 = vmatprep.mubr.bf16.mxu0 0
        %656 = vmatmul.mubr.bf16.gmra.mrb[0].mxu0 %v297
        %v657 = vpop.f32.mrb[0].mxu0
        %v658 = vadd.f32 %v346, %v657
        %v659 = vpop.f32.mrb[0].mxu0
        %v660 = vpop.f32.mrb[0].mxu0
        %v661 = vadd.f32 %v346, %v660
        %v662 = vpop.f32.mrb[0].mxu0
        %663 = vmatprep.mubr.bf16.mxu0 0
        %664 = vmatmul.mubr.bf16.gmra.mrb[0].mxu0 %v298
        %v665 = vpop.f32.mrb[0].mxu0
        %v666 = vadd.f32 %v346, %v665
        %v667 = vpop.f32.mrb[0].mxu0
        %v668 = vpop.f32.mrb[0].mxu0
        %v669 = vadd.f32 %v346, %v668
        %v670 = vpop.f32.mrb[0].mxu0
        %671 = vmatprep.mubr.bf16.mxu0 0
        %672 = vmatmul.mubr.bf16.gmra.mrb[0].mxu0 %v299
        %v673 = vpop.f32.mrb[0].mxu0
        %v674 = vadd.f32 %v346, %v673
        %v675 = vpop.f32.mrb[0].mxu0
        %v676 = vpop.f32.mrb[0].mxu0
        %v677 = vadd.f32 %v346, %v676
        %v678 = vpop.f32.mrb[0].mxu0
        %679 = vmatprep.mubr.bf16.mxu0 0
        %680 = vmatmul.mubr.bf16.gmra.mrb[0].mxu0 %v300
        %v681 = vpop.f32.mrb[0].mxu0
        %v682 = vadd.f32 %v346, %v681
        %v683 = vpop.f32.mrb[0].mxu0
        %v684 = vpop.f32.mrb[0].mxu0
        %v685 = vadd.f32 %v346, %v684
        %v686 = vpop.f32.mrb[0].mxu0
        %687 = vdwg.mxu0
        %v688 = vpack.c.bf16 %v517, %v513
        %v689 = vpack.c.bf16 %v527, %v523
        %v690 = vpack.c.bf16 %v537, %v533
        %v691 = vpack.c.bf16 %v547, %v543
        %v692 = vpack.c.bf16 %v557, %v553
        %v693 = vpack.c.bf16 %v567, %v563
        %v694 = vpack.c.bf16 %v577, %v573
        %v695 = vpack.c.bf16 %v587, %v583
        %v704 = vunpack.c.l.b16 %v688
        %v705 = vunpack.c.h.b16 %v688
        %v706 = vunpack.c.l.b16 %v689
        %v707 = vunpack.c.h.b16 %v689
        %v708 = vunpack.c.l.b16 %v690
        %v709 = vunpack.c.h.b16 %v690
        %v710 = vunpack.c.l.b16 %v691
        %v711 = vunpack.c.h.b16 %v691
        %v712 = vunpack.c.l.b16 %v692
        %v713 = vunpack.c.h.b16 %v692
        %v714 = vunpack.c.l.b16 %v693
        %v715 = vunpack.c.h.b16 %v693
        %v716 = vunpack.c.l.b16 %v694
        %v717 = vunpack.c.h.b16 %v694
        %v718 = vunpack.c.l.b16 %v695
        %v719 = vunpack.c.h.b16 %v695
        %v720 = vpack.c.b16 %v704, %v704
        %v721 = vpack.c.b16 %v705, %v705
        %v722 = vpack.c.b16 %v706, %v706
        %v723 = vpack.c.b16 %v707, %v707
        %v724 = vpack.c.b16 %v708, %v708
        %v725 = vpack.c.b16 %v709, %v709
        %v726 = vpack.c.b16 %v710, %v710
        %v727 = vpack.c.b16 %v711, %v711
        %v728 = vpack.c.b16 %v712, %v712
        %v729 = vpack.c.b16 %v713, %v713
        %v730 = vpack.c.b16 %v714, %v714
        %v731 = vpack.c.b16 %v715, %v715
        %v732 = vpack.c.b16 %v716, %v716
        %v733 = vpack.c.b16 %v717, %v717
        %v734 = vpack.c.b16 %v718, %v718
        %v735 = vpack.c.b16 %v719, %v719
        %752 = vst [vmem:[%s261] sm:$0xf] %v720
        %753 = vst [vmem:[%s261 + $0x4] sm:$0xf] %v721
        %754 = vst [vmem:[%s261 + $0x8] sm:$0xf] %v722
        %755 = vst [vmem:[%s261 + $0xc] sm:$0xf] %v723
        %756 = vst [vmem:[%s261 + $0x10] sm:$0xf] %v724
        %757 = vst [vmem:[%s261 + $0x14] sm:$0xf] %v725
        %758 = vst [vmem:[%s261 + $0x18] sm:$0xf] %v726
        %759 = vst [vmem:[%s261 + $0x1c] sm:$0xf] %v727
        %760 = vst [vmem:[%s261 + $0x20] sm:$0xf] %v728
        %761 = vst [vmem:[%s261 + $0x24] sm:$0xf] %v729
        %762 = vst [vmem:[%s261 + $0x28] sm:$0xf] %v730
        %763 = vst [vmem:[%s261 + $0x2c] sm:$0xf] %v731
        %764 = vst [vmem:[%s261 + $0x30] sm:$0xf] %v732
        %765 = vst [vmem:[%s261 + $0x34] sm:$0xf] %v733
        %766 = vst [vmem:[%s261 + $0x38] sm:$0xf] %v734
        %767 = vst [vmem:[%s261 + $0x3c] sm:$0xf] %v735
        %v768 = vpack.c.bf16 %v519, %v515
        %v769 = vpack.c.bf16 %v529, %v525
        %v770 = vpack.c.bf16 %v539, %v535
        %v771 = vpack.c.bf16 %v549, %v545
        %v772 = vpack.c.bf16 %v559, %v555
        %v773 = vpack.c.bf16 %v569, %v565
        %v774 = vpack.c.bf16 %v579, %v575
        %v775 = vpack.c.bf16 %v589, %v585
        %v784 = vunpack.c.l.b16 %v768
        %v785 = vunpack.c.h.b16 %v768
        %v786 = vunpack.c.l.b16 %v769
        %v787 = vunpack.c.h.b16 %v769
        %v788 = vunpack.c.l.b16 %v770
        %v789 = vunpack.c.h.b16 %v770
        %v790 = vunpack.c.l.b16 %v771
        %v791 = vunpack.c.h.b16 %v771
        %v792 = vunpack.c.l.b16 %v772
        %v793 = vunpack.c.h.b16 %v772
        %v794 = vunpack.c.l.b16 %v773
        %v795 = vunpack.c.h.b16 %v773
        %v796 = vunpack.c.l.b16 %v774
        %v797 = vunpack.c.h.b16 %v774
        %v798 = vunpack.c.l.b16 %v775
        %v799 = vunpack.c.h.b16 %v775
        %v800 = vpack.c.b16 %v784, %v784
        %v801 = vpack.c.b16 %v785, %v785
        %v802 = vpack.c.b16 %v786, %v786
        %v803 = vpack.c.b16 %v787, %v787
        %v804 = vpack.c.b16 %v788, %v788
        %v805 = vpack.c.b16 %v789, %v789
        %v806 = vpack.c.b16 %v790, %v790
        %v807 = vpack.c.b16 %v791, %v791
        %v808 = vpack.c.b16 %v792, %v792
        %v809 = vpack.c.b16 %v793, %v793
        %v810 = vpack.c.b16 %v794, %v794
        %v811 = vpack.c.b16 %v795, %v795
        %v812 = vpack.c.b16 %v796, %v796
        %v813 = vpack.c.b16 %v797, %v797
        %v814 = vpack.c.b16 %v798, %v798
        %v815 = vpack.c.b16 %v799, %v799
        %832 = vst [vmem:[%s268] sm:$0xf] %v800
        %833 = vst [vmem:[%s268 + $0x4] sm:$0xf] %v801
        %834 = vst [vmem:[%s268 + $0x8] sm:$0xf] %v802
        %835 = vst [vmem:[%s268 + $0xc] sm:$0xf] %v803
        %836 = vst [vmem:[%s268 + $0x10] sm:$0xf] %v804
        %837 = vst [vmem:[%s268 + $0x14] sm:$0xf] %v805
        %838 = vst [vmem:[%s268 + $0x18] sm:$0xf] %v806
        %839 = vst [vmem:[%s268 + $0x1c] sm:$0xf] %v807
        %840 = vst [vmem:[%s268 + $0x20] sm:$0xf] %v808
        %841 = vst [vmem:[%s268 + $0x24] sm:$0xf] %v809
        %842 = vst [vmem:[%s268 + $0x28] sm:$0xf] %v810
        %843 = vst [vmem:[%s268 + $0x2c] sm:$0xf] %v811
        %844 = vst [vmem:[%s268 + $0x30] sm:$0xf] %v812
        %845 = vst [vmem:[%s268 + $0x34] sm:$0xf] %v813
        %846 = vst [vmem:[%s268 + $0x38] sm:$0xf] %v814
        %847 = vst [vmem:[%s268 + $0x3c] sm:$0xf] %v815
        %v848 = vpack.c.bf16 %v629, %v626
        %v849 = vpack.c.bf16 %v637, %v634
        %v850 = vpack.c.bf16 %v645, %v642
        %v851 = vpack.c.bf16 %v653, %v650
        %v852 = vpack.c.bf16 %v661, %v658
        %v853 = vpack.c.bf16 %v669, %v666
        %v854 = vpack.c.bf16 %v677, %v674
        %v855 = vpack.c.bf16 %v685, %v682
        %v864 = vunpack.c.l.b16 %v848
        %v865 = vunpack.c.h.b16 %v848
        %v866 = vunpack.c.l.b16 %v849
        %v867 = vunpack.c.h.b16 %v849
        %v868 = vunpack.c.l.b16 %v850
        %v869 = vunpack.c.h.b16 %v850
        %v870 = vunpack.c.l.b16 %v851
        %v871 = vunpack.c.h.b16 %v851
        %v872 = vunpack.c.l.b16 %v852
        %v873 = vunpack.c.h.b16 %v852
        %v874 = vunpack.c.l.b16 %v853
        %v875 = vunpack.c.h.b16 %v853
        %v876 = vunpack.c.l.b16 %v854
        %v877 = vunpack.c.h.b16 %v854
        %v878 = vunpack.c.l.b16 %v855
        %v879 = vunpack.c.h.b16 %v855
        %v880 = vpack.c.b16 %v864, %v864
        %v881 = vpack.c.b16 %v865, %v865
        %v882 = vpack.c.b16 %v866, %v866
        %v883 = vpack.c.b16 %v867, %v867
        %v884 = vpack.c.b16 %v868, %v868
        %v885 = vpack.c.b16 %v869, %v869
        %v886 = vpack.c.b16 %v870, %v870
        %v887 = vpack.c.b16 %v871, %v871
        %v888 = vpack.c.b16 %v872, %v872
        %v889 = vpack.c.b16 %v873, %v873
        %v890 = vpack.c.b16 %v874, %v874
        %v891 = vpack.c.b16 %v875, %v875
        %v892 = vpack.c.b16 %v876, %v876
        %v893 = vpack.c.b16 %v877, %v877
        %v894 = vpack.c.b16 %v878, %v878
        %v895 = vpack.c.b16 %v879, %v879
        %912 = vst [vmem:[%s275] sm:$0xf] %v880
        %913 = vst [vmem:[%s275 + $0x4] sm:$0xf] %v881
        %914 = vst [vmem:[%s275 + $0x8] sm:$0xf] %v882
        %915 = vst [vmem:[%s275 + $0xc] sm:$0xf] %v883
        %916 = vst [vmem:[%s275 + $0x10] sm:$0xf] %v884
        %917 = vst [vmem:[%s275 + $0x14] sm:$0xf] %v885
        %918 = vst [vmem:[%s275 + $0x18] sm:$0xf] %v886
        %919 = vst [vmem:[%s275 + $0x1c] sm:$0xf] %v887
        %920 = vst [vmem:[%s275 + $0x20] sm:$0xf] %v888
        %921 = vst [vmem:[%s275 + $0x24] sm:$0xf] %v889
        %922 = vst [vmem:[%s275 + $0x28] sm:$0xf] %v890
        %923 = vst [vmem:[%s275 + $0x2c] sm:$0xf] %v891
        %924 = vst [vmem:[%s275 + $0x30] sm:$0xf] %v892
        %925 = vst [vmem:[%s275 + $0x34] sm:$0xf] %v893
        %926 = vst [vmem:[%s275 + $0x38] sm:$0xf] %v894
        %927 = vst [vmem:[%s275 + $0x3c] sm:$0xf] %v895
        %s928 = sand.u32 %s103, 1
        %s929 = scalar_lea.sflag [#allocation4], %s928
        %s930 = sand.u32 %s103, 1
        %s931 = smul.addr %s930, 64
        %s932 = scalar_lea.vmem [#allocation7], %s931
        %s933 = sand.u32 %s27, 1
        %s934 = scalar_lea.sflag [#allocation9], %s933
        %s935 = sand.u32 %s129, 1
        %s936 = smul.addr %s935, 64
        %s937 = scalar_lea.vmem [#allocation8], %s936
        %s938 = sand.u32 %s27, 1
        %s939 = scalar_lea.sflag [#allocation9], %s938
        %s940 = sand.u32 %s155, 1
        %s941 = smul.addr %s940, 64
        %s942 = scalar_lea.vmem [#allocation10], %s941
        // Predicated region
        $region41: #{tpu_custom_call.1} parent=31 // pred_check
          %p943 = pneg %p113
        $region42: #{tpu_custom_call.1} parent=31 // pred_check_branch
          %945 = sbr.rel (%p943) target = $region44
        $region43: #{tpu_custom_call.1} parent=31 // pred_region
          %s947 = ssub.s32 1024, 1024
          %948 = vsyncadd %s929, %s947
          %s949 = smul.addr %s27, 16
          %s950 = smul.addr %s949, 64
          %s951 = scalar_lea.hbm %s3, %s950
          %s952 = sshll.u32 %s932, 4
          %s953 = int_to_ptr.vmem [resolvable:$true] %s952
          %958 = dma.vmem_to_hbm [thread:$0]  %s953, 1024, %s951, %s929, 64, 64, 4
        $region44: #{tpu_custom_call.1} parent=31 // pred_fallthru
          _
        // Predicated region
        $region45: #{tpu_custom_call.1} parent=31 // pred_check
          %p959 = pneg %p139
        $region46: #{tpu_custom_call.1} parent=31 // pred_check_branch
          %961 = sbr.rel (%p959) target = $region48
        $region47: #{tpu_custom_call.1} parent=31 // pred_region
          %s963 = ssub.s32 1024, 1024
          %964 = vsyncadd %s934, %s963
          %s965 = smul.addr %s27, 16
          %s966 = smul.addr %s965, 64
          %s967 = scalar_lea.hbm %s4, %s966
          %s968 = sshll.u32 %s937, 4
          %s969 = int_to_ptr.vmem [resolvable:$true] %s968
          %974 = dma.vmem_to_hbm [thread:$0]  %s969, 1024, %s967, %s934, 64, 64, 4
        $region48: #{tpu_custom_call.1} parent=31 // pred_fallthru
          _
        // Predicated region
        $region49: #{tpu_custom_call.1} parent=31 // pred_check
          %p975 = pneg %p165
        $region50: #{tpu_custom_call.1} parent=31 // pred_check_branch
          %977 = sbr.rel (%p975) target = $region52
        $region51: #{tpu_custom_call.1} parent=31 // pred_region
          %s979 = ssub.s32 1024, 1024
          %980 = vsyncadd %s939, %s979
          %s981 = smul.addr %s27, 16
          %s982 = smul.addr %s981, 64
          %s983 = scalar_lea.hbm %s5, %s982
          %s984 = sshll.u32 %s942, 4
          %s985 = int_to_ptr.vmem [resolvable:$true] %s984
          %990 = dma.vmem_to_hbm [thread:$0]  %s985, 1024, %s983, %s939, 64, 64, 4
        $region52: #{tpu_custom_call.1} parent=31 // pred_fallthru
          _
      $region32: #{tpu_custom_call.1} parent=5 // pred_fallthru
        _
      %p991 = scmp.le.s32.totalorder 2, %s22
      // Predicated region
      $region53: #{tpu_custom_call.1} parent=5 // pred_check
        %p992 = pneg %p991
      $region54: #{tpu_custom_call.1} parent=5 // pred_check_branch
        %994 = sbr.rel (%p992) target = $region56
      $region55: #{tpu_custom_call.1} parent=5 // pred_region
        %s995 = ssub.s32 %s22, 2
        // Predicated region
        $region57: #{tpu_custom_call.1} parent=55 // pred_check
          %p996 = pneg %p119
        $region58: #{tpu_custom_call.1} parent=55 // pred_check_branch
          %998 = sbr.rel (%p996) target = $region60
        $region59: #{tpu_custom_call.1} parent=55 // pred_region
          %s999 = sand.u32 %s104, 1
          %s1000 = scalar_lea.sflag [#allocation4], %s999
          %s1001 = sand.u32 %s104, 1
          %s1002 = smul.addr %s1001, 64
          %s1003 = scalar_lea.vmem [#allocation7], %s1002
          %1004 = dma.done %s1000, 1024
        $region60: #{tpu_custom_call.1} parent=55 // pred_fallthru
          _
        // Predicated region
        $region61: #{tpu_custom_call.1} parent=55 // pred_check
          %p1005 = pneg %p145
        $region62: #{tpu_custom_call.1} parent=55 // pred_check_branch
          %1007 = sbr.rel (%p1005) target = $region64
        $region63: #{tpu_custom_call.1} parent=55 // pred_region
          %s1008 = sand.u32 %s28, 1
          %s1009 = scalar_lea.sflag [#allocation9], %s1008
          %s1010 = sand.u32 %s130, 1
          %s1011 = smul.addr %s1010, 64
          %s1012 = scalar_lea.vmem [#allocation8], %s1011
          %1013 = dma.done %s1009, 1024
        $region64: #{tpu_custom_call.1} parent=55 // pred_fallthru
          _
        // Predicated region
        $region65: #{tpu_custom_call.1} parent=55 // pred_check
          %p1014 = pneg %p171
        $region66: #{tpu_custom_call.1} parent=55 // pred_check_branch
          %1016 = sbr.rel (%p1014) target = $region68
        $region67: #{tpu_custom_call.1} parent=55 // pred_region
          %s1017 = sand.u32 %s28, 1
          %s1018 = scalar_lea.sflag [#allocation9], %s1017
          %s1019 = sand.u32 %s156, 1
          %s1020 = smul.addr %s1019, 64
          %s1021 = scalar_lea.vmem [#allocation10], %s1020
          %1022 = dma.done %s1018, 1024
        $region68: #{tpu_custom_call.1} parent=55 // pred_fallthru
          _
      $region56: #{tpu_custom_call.1} parent=5 // pred_fallthru
        _
    $region6: #{tpu_custom_call.1} parent=1 // loop_footer
      %s26 = sadd.s32 1, %s22
    $region7: #{tpu_custom_call.1} parent=1 // loop_footer_branch
      %21 = sbr.rel target = $region3
    $region8: #{tpu_custom_call.1} parent=1 // loop_exit
      _
    %1023 = vsyncpa [#allocation3], 1
    %s1024 = scalar_lea.sflag [#allocation3], 1
    %1025 = vsyncpa %s1024, 1
    %1026 = vsyncpa [#allocation6], 1
    %1027 = vsyncpa [#allocation4], 1
    %s1028 = scalar_lea.sflag [#allocation4], 1
    %1029 = vsyncpa %s1028, 1
    %1030 = vsyncpa [#allocation9], 1
    %s1031 = scalar_lea.sflag [#allocation9], 1
    %1032 = vsyncpa %s1031, 1

</llo_original>
